<compile_context>
chip_gen: v7x
topology: tpu7x:2x2x1
jax: 0.10.0
libtpu: 0.0.40
codegen_flags: <defaults>
</compile_context>

<pallas_src>
import functools

import jax
import jax.numpy as jnp
from jax.experimental import pallas as pl
from jax.experimental.pallas import tpu as pltpu


def _visual_base_kernel(x_ref, w_ref, b_ref, o_ref, acc_ref, *,
                        inv_spatial, true_s, tile_s, ragged):
    # x_ref:   (1, 512, tS)  current spatial tile of one batch row (NCHW slab)
    # w_ref:   (E, 512)      resident linear weight (PyTorch layout, no .T)
    # b_ref:   (E, 1)        resident bias
    # o_ref:   (1, E, 1)     output column for this batch index
    # acc_ref: (512, 1)      f32 running spatial sum (persists across s steps)
    s = pl.program_id(1)

    @pl.when(s == 0)
    def _init():
        acc_ref[...] = jnp.zeros_like(acc_ref)

    x = x_ref[0].astype(jnp.float32)                       # (512, tS)
    if ragged:
        # Mask the out-of-range lanes of the last (partial) spatial tile.
        lane = jax.lax.broadcasted_iota(jnp.int32, x.shape, 1)
        limit = true_s - s * tile_s                        # > tS except last step
        x = jnp.where(lane < limit, x, jnp.float32(0.0))

    # Lane-axis (spatial) reduction into the (512, 1) accumulator — XLU slot,
    # free filler for this HBM-bound stream.
    acc_ref[...] += jnp.sum(x, axis=-1, keepdims=True)

    @pl.when(s == pl.num_programs(1) - 1)
    def _finalize():
        pooled = acc_ref[...] * jnp.float32(inv_spatial)    # (512, 1) true mean
        out = jnp.dot(w_ref[...].astype(jnp.float32), pooled,
                      preferred_element_type=jnp.float32)   # (E, 1) on MXU
        out = out + b_ref[...].astype(jnp.float32)
        o_ref[0] = out.astype(o_ref.dtype)


def visual_base_forward(f4, weight, bias, *, spatial_tile=2048):
    """f4: (B, 512, H, W); weight: (embed_dim, 512); bias: (embed_dim,)."""
    B, C, H, W = f4.shape
    assert C == 512, "Visual_base expects 512 channels in features[3]"
    S = H * W
    E = weight.shape[0]

    # Free reshape only — NCHW order is kept, no transpose / no pad in HBM.
    x = f4.reshape(B, C, S)

    if S <= spatial_tile:
        tS, n_s = S, 1                      # single full-extent spatial block
    else:
        tS = max(128, (spatial_tile // 128) * 128)   # lane-aligned tile
        n_s = pl.cdiv(S, tS)
    ragged = (S % tS) != 0

    kernel = functools.partial(
        _visual_base_kernel,
        inv_spatial=1.0 / float(S), true_s=S, tile_s=tS, ragged=ragged)

    out3 = pl.pallas_call(
        kernel,
        out_shape=jax.ShapeDtypeStruct((B, E, 1), f4.dtype),
        grid_spec=pltpu.PrefetchScalarGridSpec(
            num_scalar_prefetch=0,
            grid=(B, n_s),
            in_specs=[
                pl.BlockSpec((1, C, tS), lambda b, s: (b, 0, s)),   # streamed input
                pl.BlockSpec((E, C), lambda b, s: (0, 0)),          # resident weight
                pl.BlockSpec((E, 1), lambda b, s: (0, 0)),          # resident bias
            ],
            out_specs=pl.BlockSpec((1, E, 1), lambda b, s: (b, 0, 0)),
            scratch_shapes=[pltpu.VMEM((C, 1), jnp.float32)],
        ),
        compiler_params=pltpu.CompilerParams(
            dimension_semantics=("parallel", "arbitrary"),
            vmem_limit_bytes=32 * 1024 * 1024,   # v5e default (16 MiB) is too small
        ),
    )(x, weight, bias.reshape(E, 1))
    return out3.reshape(B, E)


def reference_forward(f4, weight, bias):
    B = f4.shape[0]
    pooled = jnp.mean(f4.reshape(B, 512, -1), axis=-1)
    return pooled @ weight.T + bias


if __name__ == "__main__":
    key = jax.random.PRNGKey(0)
    k_f, k_f2, k_w, k_b = jax.random.split(key, 4)

    B, C, embed_dim = 2, 512, 32          # 512 channels required by Linear(512, E)

    # Deterministic Linear(512, embed_dim) init: uniform(-1/sqrt(512), 1/sqrt(512)).
    bound = 1.0 / (512.0 ** 0.5)
    weight = jax.random.uniform(k_w, (embed_dim, 512), jnp.float32, -bound, bound)
    bias = jax.random.uniform(k_b, (embed_dim,), jnp.float32, -bound, bound)

    # --- Run 1: small map, single spatial tile. ---
    f4 = jax.random.normal(k_f, (B, C, 8, 8), dtype=jnp.float32)
    features = [None, None, None, f4]      # module only uses features[3]
    out = jax.block_until_ready(visual_base_forward(features[3], weight, bias))
    ref = reference_forward(f4, weight, bias)
    assert out.shape == (B, embed_dim)
    assert jnp.allclose(out, ref, atol=1e-4, rtol=1e-4), "mismatch vs reference (run 1)"

    # --- Run 2: multi-tile grid with a ragged (masked) spatial tail. ---
    f4b = jax.random.normal(k_f2, (B, C, 14, 14), dtype=jnp.float32)   # S = 196
    out2 = jax.block_until_ready(
        visual_base_forward(f4b, weight, bias, spatial_tile=128))      # n_s=2, ragged
    ref2 = reference_forward(f4b, weight, bias)
    assert jnp.allclose(out2, ref2, atol=1e-4, rtol=1e-4), "mismatch vs reference (run 2)"

    print("KERNEL_OK")
</pallas_src>

<mosaic_0001>
module attributes {stable_mosaic.version = 11 : i64} {
  func.func @_visual_base_kernel(%arg0: i32, %arg1: i32, %arg2: memref<1x512x64xf32, #tpu.memory_space<vmem>>, %arg3: memref<32x512xf32, #tpu.memory_space<vmem>>, %arg4: memref<32x1xf32, #tpu.memory_space<vmem>>, %arg5: memref<1x32x1xf32, #tpu.memory_space<vmem>>, %arg6: memref<512x1xf32, #tpu.memory_space<vmem>>) attributes {dimension_semantics = [#tpu.dimension_semantics<parallel>, #tpu.dimension_semantics<arbitrary>], iteration_bounds = array<i64: 2, 1>, scalar_prefetch = 0 : i64, scratch_operands = 1 : i64, tpu.core_type = #tpu.core_type<tc>, window_params = [{transform_indices = @transform_0, window_bounds = array<i64: 1, 512, 64>}, {pipeline_mode = #tpu.pipeline_mode<synchronous>, transform_indices = @transform_1, window_bounds = array<i64: 32, 512>}, {pipeline_mode = #tpu.pipeline_mode<synchronous>, transform_indices = @transform_2, window_bounds = array<i64: 32, 1>}, {transform_indices = @transform_3, window_bounds = array<i64: 1, 32, 1>}]} {
    %c0_i32 = arith.constant 0 : i32
    %0 = arith.cmpi eq, %arg1, %c0_i32 : i32
    %1 = arith.extui %0 : i1 to i32
    %c0_i32_0 = arith.constant 0 : i32
    %2 = arith.cmpi ne, %1, %c0_i32_0 : i32
    scf.if %2 {
      %cst_9 = arith.constant 0.000000e+00 : f32
      %13 = vector.broadcast %cst_9 : f32 to vector<512x1xf32>
      %c0_10 = arith.constant 0 : index
      %c0_11 = arith.constant 0 : index
      %14 = vector.load %arg6[%c0_10, %c0_11] : memref<512x1xf32, #tpu.memory_space<vmem>>, vector<512x1xf32>
      tpu.vector_store %arg6[%c0_10, %c0_11], %13 {strides = array<i32>} : memref<512x1xf32, #tpu.memory_space<vmem>>, vector<512x1xf32>,
    } else {
    }
    %c0 = arith.constant 0 : index
    %c0_1 = arith.constant 0 : index
    %c0_2 = arith.constant 0 : index
    %3 = vector.load %arg2[%c0, %c0_1, %c0_2] : memref<1x512x64xf32, #tpu.memory_space<vmem>>, vector<1x512x64xf32>
    %4 = vector.shape_cast %3 : vector<1x512x64xf32> to vector<512x64xf32>
    %c0_3 = arith.constant 0 : index
    %c0_4 = arith.constant 0 : index
    %5 = vector.load %arg6[%c0_3, %c0_4] : memref<512x1xf32, #tpu.memory_space<vmem>>, vector<512x1xf32>
    %cst = arith.constant dense<0.000000e+00> : vector<512xf32>
    %6 = vector.multi_reduction <add>, %4, %cst [1] : vector<512x64xf32> to vector<512xf32>
    %7 = vector.shape_cast %6 : vector<512xf32> to vector<512x1xf32>
    %8 = arith.addf %5, %7 : vector<512x1xf32>
    %c0_5 = arith.constant 0 : index
    %c0_6 = arith.constant 0 : index
    %9 = vector.load %arg6[%c0_5, %c0_6] : memref<512x1xf32, #tpu.memory_space<vmem>>, vector<512x1xf32>
    tpu.vector_store %arg6[%c0_5, %c0_6], %8 {strides = array<i32>} : memref<512x1xf32, #tpu.memory_space<vmem>>, vector<512x1xf32>,
    %c0_i32_7 = arith.constant 0 : i32
    %10 = arith.cmpi eq, %arg1, %c0_i32_7 : i32
    %11 = arith.extui %10 : i1 to i32
    %c0_i32_8 = arith.constant 0 : i32
    %12 = arith.cmpi ne, %11, %c0_i32_8 : i32
    scf.if %12 {
      %c0_9 = arith.constant 0 : index
      %c0_10 = arith.constant 0 : index
      %13 = vector.load %arg6[%c0_9, %c0_10] : memref<512x1xf32, #tpu.memory_space<vmem>>, vector<512x1xf32>
      %cst_11 = arith.constant 1.562500e-02 : f32
      %14 = vector.broadcast %cst_11 : f32 to vector<512x1xf32>
      %15 = arith.mulf %13, %14 : vector<512x1xf32>
      %c0_12 = arith.constant 0 : index
      %c0_13 = arith.constant 0 : index
      %16 = vector.load %arg3[%c0_12, %c0_13] : memref<32x512xf32, #tpu.memory_space<vmem>>, vector<32x512xf32>
      %cst_14 = arith.constant dense<0.000000e+00> : vector<32x1xf32>
      %17 = tpu.matmul %16, %15, %cst_14 {dimension_numbers = #tpu.dot_dimension_numbers<[1], [0], [0], [1], [0, 0, 1, 1], [], []>} : vector<32x512xf32>, vector<512x1xf32>, vector<32x1xf32> -> vector<32x1xf32>
      %c0_15 = arith.constant 0 : index
      %c0_16 = arith.constant 0 : index
      %18 = vector.load %arg4[%c0_15, %c0_16] : memref<32x1xf32, #tpu.memory_space<vmem>>, vector<32x1xf32>
      %19 = arith.addf %17, %18 : vector<32x1xf32>
      %c0_17 = arith.constant 0 : index
      %c0_18 = arith.constant 0 : index
      %c0_19 = arith.constant 0 : index
      %20 = vector.load %arg5[%c0_17, %c0_18, %c0_19] : memref<1x32x1xf32, #tpu.memory_space<vmem>>, vector<1x32x1xf32>
      %21 = vector.shape_cast %20 : vector<1x32x1xf32> to vector<32x1xf32>
      %22 = vector.shape_cast %19 : vector<32x1xf32> to vector<1x32x1xf32>
      tpu.vector_store %arg5[%c0_17, %c0_18, %c0_19], %22 {strides = array<i32>} : memref<1x32x1xf32, #tpu.memory_space<vmem>>, vector<1x32x1xf32>,
    } else {
    }
    return
  }
  func.func @transform_0(%arg0: i32, %arg1: i32) -> (i32, i32, i32) {
    %c0_i32 = arith.constant 0 : i32
    %c0_i32_0 = arith.constant 0 : i32
    return %arg0, %c0_i32, %arg1 : i32, i32, i32
  }
  func.func @transform_1(%arg0: i32, %arg1: i32) -> (i32, i32) {
    %c0_i32 = arith.constant 0 : i32
    %c0_i32_0 = arith.constant 0 : i32
    %c0_i32_1 = arith.constant 0 : i32
    return %c0_i32, %c0_i32_0 : i32, i32
  }
  func.func @transform_2(%arg0: i32, %arg1: i32) -> (i32, i32) {
    %c0_i32 = arith.constant 0 : i32
    %c0_i32_0 = arith.constant 0 : i32
    %c0_i32_1 = arith.constant 0 : i32
    return %c0_i32, %c0_i32_0 : i32, i32
  }
  func.func @transform_3(%arg0: i32, %arg1: i32) -> (i32, i32, i32) {
    %c0_i32 = arith.constant 0 : i32
    %c0_i32_0 = arith.constant 0 : i32
    %c0_i32_1 = arith.constant 0 : i32
    return %arg0, %c0_i32, %c0_i32_0 : i32, i32, i32
  }
}

</mosaic_0001>

<llo_original>
// kernel: tpu_custom_call.1
$region0: #{tpu_custom_call.1}
  #allocation0 [shape = 'u32[]', space=smem, size = 0x4, offset = 0x4, fixed_abs, tag = 'smem constant byte address 0x4 - core index']
  #allocation1 [shape = 'u32[144,128]{1,0:T(1,128)}', space=vmem, size = 0x12000, scoped, tag = 'internal scratch']
  #allocation2 [shape = 'f32[512,1]{1,0:T(8,128)}', space=vmem, size = 0x40000, scoped, tag = 'scratch operand']
  %s0 = inlined_call_operand.vmem [shape: f32[2,512,64], index: 0, kind: input, shape index: {}]
  %s1 = inlined_call_operand.vmem [shape: f32[32,512], index: 1, kind: input, shape index: {}]
  %s2 = inlined_call_operand.vmem [shape: f32[32,1], index: 2, kind: input, shape index: {}]
  %s3 = inlined_call_operand.vmem [shape: f32[2,32,1], index: 3, kind: output, shape index: {}]
  %s4 = sld [smem:[#allocation0]]
  $region53: #{tpu_custom_call.1} parent=0
    _
  %s6 = ssub.s32 1, %s4
  %s7 = scalar_select 0, %s6, %s4
  loop: start=0, step=1, limit=4
  $region2: #{tpu_custom_call.1} parent=0 // loop_pre_header
    _
  $region3: #{tpu_custom_call.1} parent=0 // loop_header
    %s9 = sphi 0, %s13
    %p10 = scmp.ge.s32.totalorder %s9, 4
    %s16 = sphi 0, %s28
    %s17 = sphi 0, %s24
    %s18 = sphi 0, %s16
    %s19 = sphi 0, %s17
    %s20 = sphi 0, %s18
    %s21 = sphi 0, %s19
    %s33 = sphi 0, %s35
    %s36 = sphi 0, %s33
    %s37 = sphi 0, %s36
    %s53 = sphi 0, %s37
    %s57 = sphi 0, %s57
    %s59 = sphi 0, %s57
    %s60 = sphi 0, %s59
    %s74 = sphi 0, %s60
    %s78 = sphi 0, %s78
    %s80 = sphi 0, %s78
    %s81 = sphi 0, %s80
    %s95 = sphi 0, %s81
    %s101 = sphi 0, %s103
    %s104 = sphi 0, %s101
    %s105 = sphi 0, %s104
    %s121 = sphi 0, %s105
  $region4: #{tpu_custom_call.1} parent=0 // loop_header_branch
    %12 = sbr.rel (%p10) target = $region8
  $region5: #{tpu_custom_call.1} parent=0 // loop_body
    %s14 = ssub.s32 %s9, 1
    %s15 = ssub.s32 %s9, 2
    %s22 = sadd.s32 1, %s17
    %p23 = scmp.ge.s32.totalorder %s22, 1
    %s24 = scalar_select %p23, 0, %s22
    %s25 = sadd.s32 1, %s16
    %s26 = scalar_select %p23, %s25, %s16
    %p27 = scmp.ge.s32.totalorder %s26, 2
    %s28 = scalar_select %p27, 0, %s26
    %s29 = ssub.s32 %s16, %s28
    %s30 = ssub.s32 %s17, %s24
    %s31 = sor.u32 %s29, %s30
    %p32 = scmp.eq.s32.totalorder %s31, 0
    %s34 = sadd.s32 %s33, 1
    %s35 = scalar_select %p32, %s33, %s34
    %p38 = pneg %p32
    %p39 = scmp.eq.s32.totalorder %s9, 1
    %p40 = por %p38, %p39
    %p41 = scmp.ne.s32.totalorder %s33, %s36
    %p42 = scmp.eq.s32.totalorder %s9, 0
    %p43 = por %p41, %p42
    %p44 = scmp.ne.s32.totalorder %s33, %s36
    %p45 = scmp.eq.s32.totalorder %s14, 1
    %p46 = por %p44, %p45
    %p47 = scmp.ne.s32.totalorder %s36, %s37
    %p48 = scmp.eq.s32.totalorder %s14, 0
    %p49 = por %p47, %p48
    %p50 = scmp.ne.s32.totalorder %s36, %s37
    %p51 = scmp.eq.s32.totalorder %s15, 1
    %p52 = por %p50, %p51
    %p54 = scmp.ne.s32.totalorder %s37, %s53
    %p55 = scmp.eq.s32.totalorder %s15, 0
    %p56 = por %p54, %p55
    %s58 = sadd.s32 %s57, 1
    %p61 = scmp.eq.s32.totalorder %s9, 1
    %p62 = scmp.ne.s32.totalorder %s57, %s59
    %p63 = scmp.eq.s32.totalorder %s9, 0
    %p64 = por %p62, %p63
    %p65 = scmp.ne.s32.totalorder %s57, %s59
    %p66 = scmp.eq.s32.totalorder %s14, 1
    %p67 = por %p65, %p66
    %p68 = scmp.ne.s32.totalorder %s59, %s60
    %p69 = scmp.eq.s32.totalorder %s14, 0
    %p70 = por %p68, %p69
    %p71 = scmp.ne.s32.totalorder %s59, %s60
    %p72 = scmp.eq.s32.totalorder %s15, 1
    %p73 = por %p71, %p72
    %p75 = scmp.ne.s32.totalorder %s60, %s74
    %p76 = scmp.eq.s32.totalorder %s15, 0
    %p77 = por %p75, %p76
    %s79 = sadd.s32 %s78, 1
    %p82 = scmp.eq.s32.totalorder %s9, 1
    %p83 = scmp.ne.s32.totalorder %s78, %s80
    %p84 = scmp.eq.s32.totalorder %s9, 0
    %p85 = por %p83, %p84
    %p86 = scmp.ne.s32.totalorder %s78, %s80
    %p87 = scmp.eq.s32.totalorder %s14, 1
    %p88 = por %p86, %p87
    %p89 = scmp.ne.s32.totalorder %s80, %s81
    %p90 = scmp.eq.s32.totalorder %s14, 0
    %p91 = por %p89, %p90
    %p92 = scmp.ne.s32.totalorder %s80, %s81
    %p93 = scmp.eq.s32.totalorder %s15, 1
    %p94 = por %p92, %p93
    %p96 = scmp.ne.s32.totalorder %s81, %s95
    %p97 = scmp.eq.s32.totalorder %s15, 0
    %p98 = por %p96, %p97
    %s99 = ssub.s32 %s16, %s28
    %p100 = scmp.eq.s32.totalorder %s99, 0
    %s102 = sadd.s32 %s101, 1
    %s103 = scalar_select %p100, %s101, %s102
    %p106 = pneg %p100
    %p107 = scmp.eq.s32.totalorder %s9, 1
    %p108 = por %p106, %p107
    %p109 = scmp.ne.s32.totalorder %s101, %s104
    %p110 = scmp.eq.s32.totalorder %s9, 0
    %p111 = por %p109, %p110
    %p112 = scmp.ne.s32.totalorder %s101, %s104
    %p113 = scmp.eq.s32.totalorder %s14, 1
    %p114 = por %p112, %p113
    %p115 = scmp.ne.s32.totalorder %s104, %s105
    %p116 = scmp.eq.s32.totalorder %s14, 0
    %p117 = por %p115, %p116
    %p118 = scmp.ne.s32.totalorder %s104, %s105
    %p119 = scmp.eq.s32.totalorder %s15, 1
    %p120 = por %p118, %p119
    %p122 = scmp.ne.s32.totalorder %s105, %s121
    %p123 = scmp.eq.s32.totalorder %s15, 0
    %p124 = por %p122, %p123
    %p125 = scmp.le.s32.totalorder 1, %s9
    %p126 = scmp.lt.s32.totalorder %s9, 3
    %p127 = pnand %p125, %p126
    %p128 = pneg %p127
    // Predicated region
    $region9: #{tpu_custom_call.1} parent=5 // pred_check
      _
    $region10: #{tpu_custom_call.1} parent=5 // pred_check_branch
      %130 = sbr.rel (%p127) target = $region12
    $region11: #{tpu_custom_call.1} parent=5 // pred_region
      %s131 = ssub.s32 %s9, 1
      // Predicated region
      $region13: #{tpu_custom_call.1} parent=11 // pred_check
        %p132 = pneg %p70
      $region14: #{tpu_custom_call.1} parent=11 // pred_check_branch
        %134 = sbr.rel (%p132) target = $region16
      $region15: #{tpu_custom_call.1} parent=11 // pred_region
        _
      $region16: #{tpu_custom_call.1} parent=11 // pred_fallthru
        _
      // Predicated region
      $region17: #{tpu_custom_call.1} parent=11 // pred_check
        %p135 = pneg %p91
      $region18: #{tpu_custom_call.1} parent=11 // pred_check_branch
        %137 = sbr.rel (%p135) target = $region20
      $region19: #{tpu_custom_call.1} parent=11 // pred_region
        _
      $region20: #{tpu_custom_call.1} parent=11 // pred_fallthru
        _
    $region12: #{tpu_custom_call.1} parent=5 // pred_fallthru
      _
    %p138 = scmp.lt.s32.totalorder %s9, 2
    // Predicated region
    $region21: #{tpu_custom_call.1} parent=5 // pred_check
      %p139 = pneg %p138
    $region22: #{tpu_custom_call.1} parent=5 // pred_check_branch
      %141 = sbr.rel (%p139) target = $region24
    $region23: #{tpu_custom_call.1} parent=5 // pred_region
      // Predicated region
      $region25: #{tpu_custom_call.1} parent=23 // pred_check
        %p142 = pneg %p43
      $region26: #{tpu_custom_call.1} parent=23 // pred_check_branch
        %144 = sbr.rel (%p142) target = $region28
      $region27: #{tpu_custom_call.1} parent=23 // pred_region
        %p145 = scmp.lt.s32.totalorder %s16, 1
        %s146 = scalar_select %p145, %s16, 1
        %p147 = scmp.lt.s32.totalorder %s17, 0
        %s148 = scalar_select %p147, %s17, 0
        %s149 = smul.addr %s146, 64
        %s150 = sadd.s32 %s148, %s149
        %s151 = smul.addr %s150, 8
        %s152 = scalar_lea.vmem %s0, %s151
      $region28: #{tpu_custom_call.1} parent=23 // pred_fallthru
        _
    $region24: #{tpu_custom_call.1} parent=5 // pred_fallthru
      _
    %p153 = scmp.le.s32.totalorder 1, %s9
    %p154 = scmp.lt.s32.totalorder %s9, 3
    %p155 = pnand %p153, %p154
    %p156 = pneg %p155
    // Predicated region
    $region29: #{tpu_custom_call.1} parent=5 // pred_check
      _
    $region30: #{tpu_custom_call.1} parent=5 // pred_check_branch
      %158 = sbr.rel (%p155) target = $region32
    $region31: #{tpu_custom_call.1} parent=5 // pred_region
      %s159 = ssub.s32 %s9, 1
      %p160 = scmp.lt.s32.totalorder %s18, 1
      %s161 = scalar_select %p160, %s18, 1
      %p162 = scmp.lt.s32.totalorder %s19, 0
      %s163 = scalar_select %p162, %s19, 0
      %s164 = smul.addr %s161, 64
      %s165 = sadd.s32 %s163, %s164
      %s166 = smul.addr %s165, 8
      %s167 = scalar_lea.vmem %s0, %s166
      %p168 = pneg %p49
      %p169 = pneg %p46
      %p170 = pneg %p70
      %p171 = pneg %p67
      %p172 = pneg %p91
      %p173 = pneg %p88
      %p174 = pneg %p117
      %p175 = pneg %p114
      %p176 = scmp.lt.s32.totalorder %s18, 1
      %s177 = scalar_select %p176, %s18, 1
      %s178 = smul.addr %s177, 4
      %s179 = smul.addr %s178, 8
      %s180 = scalar_lea.vmem %s3, %s179
      %p181 = scmp.lt.s32.totalorder %s18, 1
      %s182 = scalar_select %p181, %s18, 1
      %p183 = scmp.lt.s32.totalorder %s19, 0
      %s184 = scalar_select %p183, %s19, 0
      %s185 = smul.addr %s182, 64
      %s186 = sadd.s32 %s184, %s185
      %s187 = smul.addr %s186, 8
      %s188 = scalar_lea.vmem %s0, %s187
      %p189 = scmp.lt.s32.totalorder %s18, 1
      %s190 = scalar_select %p189, %s18, 1
      %s191 = smul.addr %s190, 4
      %s192 = smul.addr %s191, 8
      %s193 = scalar_lea.vmem %s3, %s192
      %p194 = scmp.eq.s32.totalorder %s19, 0
      // Predicated region
      $region33: #{tpu_custom_call.1} parent=31 // pred_check
        %p195 = pneg %p194
      $region34: #{tpu_custom_call.1} parent=31 // pred_check_branch
        %197 = sbr.rel (%p195) target = $region36
      $region35: #{tpu_custom_call.1} parent=31 // pred_region
        %vm198 = vcmask 7168
        %199 = vst.msk [vmem:[#allocation2] sm:$0xff] %vm198, 0.0
        %200 = vst.msk [vmem:[#allocation2 + $0x8] sm:$0xff] %vm198, 0.0
        %201 = vst.msk [vmem:[#allocation2 + $0x10] sm:$0xff] %vm198, 0.0
        %202 = vst.msk [vmem:[#allocation2 + $0x18] sm:$0xff] %vm198, 0.0
        %203 = vst.msk [vmem:[#allocation2 + $0x20] sm:$0xff] %vm198, 0.0
        %204 = vst.msk [vmem:[#allocation2 + $0x28] sm:$0xff] %vm198, 0.0
        %205 = vst.msk [vmem:[#allocation2 + $0x30] sm:$0xff] %vm198, 0.0
        %206 = vst.msk [vmem:[#allocation2 + $0x38] sm:$0xff] %vm198, 0.0
        %207 = vst.msk [vmem:[#allocation2 + $0x40] sm:$0xff] %vm198, 0.0
        %208 = vst.msk [vmem:[#allocation2 + $0x48] sm:$0xff] %vm198, 0.0
        %209 = vst.msk [vmem:[#allocation2 + $0x50] sm:$0xff] %vm198, 0.0
        %210 = vst.msk [vmem:[#allocation2 + $0x58] sm:$0xff] %vm198, 0.0
        %211 = vst.msk [vmem:[#allocation2 + $0x60] sm:$0xff] %vm198, 0.0
        %212 = vst.msk [vmem:[#allocation2 + $0x68] sm:$0xff] %vm198, 0.0
        %213 = vst.msk [vmem:[#allocation2 + $0x70] sm:$0xff] %vm198, 0.0
        %214 = vst.msk [vmem:[#allocation2 + $0x78] sm:$0xff] %vm198, 0.0
        %215 = vst.msk [vmem:[#allocation2 + $0x80] sm:$0xff] %vm198, 0.0
        %216 = vst.msk [vmem:[#allocation2 + $0x88] sm:$0xff] %vm198, 0.0
        %217 = vst.msk [vmem:[#allocation2 + $0x90] sm:$0xff] %vm198, 0.0
        %218 = vst.msk [vmem:[#allocation2 + $0x98] sm:$0xff] %vm198, 0.0
        %219 = vst.msk [vmem:[#allocation2 + $0xa0] sm:$0xff] %vm198, 0.0
        %220 = vst.msk [vmem:[#allocation2 + $0xa8] sm:$0xff] %vm198, 0.0
        %221 = vst.msk [vmem:[#allocation2 + $0xb0] sm:$0xff] %vm198, 0.0
        %222 = vst.msk [vmem:[#allocation2 + $0xb8] sm:$0xff] %vm198, 0.0
        %223 = vst.msk [vmem:[#allocation2 + $0xc0] sm:$0xff] %vm198, 0.0
        %224 = vst.msk [vmem:[#allocation2 + $0xc8] sm:$0xff] %vm198, 0.0
        %225 = vst.msk [vmem:[#allocation2 + $0xd0] sm:$0xff] %vm198, 0.0
        %226 = vst.msk [vmem:[#allocation2 + $0xd8] sm:$0xff] %vm198, 0.0
        %227 = vst.msk [vmem:[#allocation2 + $0xe0] sm:$0xff] %vm198, 0.0
        %228 = vst.msk [vmem:[#allocation2 + $0xe8] sm:$0xff] %vm198, 0.0
        %229 = vst.msk [vmem:[#allocation2 + $0xf0] sm:$0xff] %vm198, 0.0
        %230 = vst.msk [vmem:[#allocation2 + $0xf8] sm:$0xff] %vm198, 0.0
        %231 = vst.msk [vmem:[#allocation2 + $0x100] sm:$0xff] %vm198, 0.0
        %232 = vst.msk [vmem:[#allocation2 + $0x108] sm:$0xff] %vm198, 0.0
        %233 = vst.msk [vmem:[#allocation2 + $0x110] sm:$0xff] %vm198, 0.0
        %234 = vst.msk [vmem:[#allocation2 + $0x118] sm:$0xff] %vm198, 0.0
        %235 = vst.msk [vmem:[#allocation2 + $0x120] sm:$0xff] %vm198, 0.0
        %236 = vst.msk [vmem:[#allocation2 + $0x128] sm:$0xff] %vm198, 0.0
        %237 = vst.msk [vmem:[#allocation2 + $0x130] sm:$0xff] %vm198, 0.0
        %238 = vst.msk [vmem:[#allocation2 + $0x138] sm:$0xff] %vm198, 0.0
        %239 = vst.msk [vmem:[#allocation2 + $0x140] sm:$0xff] %vm198, 0.0
        %240 = vst.msk [vmem:[#allocation2 + $0x148] sm:$0xff] %vm198, 0.0
        %241 = vst.msk [vmem:[#allocation2 + $0x150] sm:$0xff] %vm198, 0.0
        %242 = vst.msk [vmem:[#allocation2 + $0x158] sm:$0xff] %vm198, 0.0
        %243 = vst.msk [vmem:[#allocation2 + $0x160] sm:$0xff] %vm198, 0.0
        %244 = vst.msk [vmem:[#allocation2 + $0x168] sm:$0xff] %vm198, 0.0
        %245 = vst.msk [vmem:[#allocation2 + $0x170] sm:$0xff] %vm198, 0.0
        %246 = vst.msk [vmem:[#allocation2 + $0x178] sm:$0xff] %vm198, 0.0
        %247 = vst.msk [vmem:[#allocation2 + $0x180] sm:$0xff] %vm198, 0.0
        %248 = vst.msk [vmem:[#allocation2 + $0x188] sm:$0xff] %vm198, 0.0
        %249 = vst.msk [vmem:[#allocation2 + $0x190] sm:$0xff] %vm198, 0.0
        %250 = vst.msk [vmem:[#allocation2 + $0x198] sm:$0xff] %vm198, 0.0
        %251 = vst.msk [vmem:[#allocation2 + $0x1a0] sm:$0xff] %vm198, 0.0
        %252 = vst.msk [vmem:[#allocation2 + $0x1a8] sm:$0xff] %vm198, 0.0
        %253 = vst.msk [vmem:[#allocation2 + $0x1b0] sm:$0xff] %vm198, 0.0
        %254 = vst.msk [vmem:[#allocation2 + $0x1b8] sm:$0xff] %vm198, 0.0
        %255 = vst.msk [vmem:[#allocation2 + $0x1c0] sm:$0xff] %vm198, 0.0
        %256 = vst.msk [vmem:[#allocation2 + $0x1c8] sm:$0xff] %vm198, 0.0
        %257 = vst.msk [vmem:[#allocation2 + $0x1d0] sm:$0xff] %vm198, 0.0
        %258 = vst.msk [vmem:[#allocation2 + $0x1d8] sm:$0xff] %vm198, 0.0
        %259 = vst.msk [vmem:[#allocation2 + $0x1e0] sm:$0xff] %vm198, 0.0
        %260 = vst.msk [vmem:[#allocation2 + $0x1e8] sm:$0xff] %vm198, 0.0
        %261 = vst.msk [vmem:[#allocation2 + $0x1f0] sm:$0xff] %vm198, 0.0
        %262 = vst.msk [vmem:[#allocation2 + $0x1f8] sm:$0xff] %vm198, 0.0
      $region36: #{tpu_custom_call.1} parent=31 // pred_fallthru
        _
      %v263 = vld [vmem:[%s188] sm:$0xff]
      %v264 = vld [vmem:[%s188 + $0x8] sm:$0xff]
      %v265 = vld [vmem:[%s188 + $0x10] sm:$0xff]
      %v266 = vld [vmem:[%s188 + $0x18] sm:$0xff]
      %v267 = vld [vmem:[%s188 + $0x20] sm:$0xff]
      %v268 = vld [vmem:[%s188 + $0x28] sm:$0xff]
      %v269 = vld [vmem:[%s188 + $0x30] sm:$0xff]
      %v270 = vld [vmem:[%s188 + $0x38] sm:$0xff]
      %v271 = vld [vmem:[%s188 + $0x40] sm:$0xff]
      %v272 = vld [vmem:[%s188 + $0x48] sm:$0xff]
      %v273 = vld [vmem:[%s188 + $0x50] sm:$0xff]
      %v274 = vld [vmem:[%s188 + $0x58] sm:$0xff]
      %v275 = vld [vmem:[%s188 + $0x60] sm:$0xff]
      %v276 = vld [vmem:[%s188 + $0x68] sm:$0xff]
      %v277 = vld [vmem:[%s188 + $0x70] sm:$0xff]
      %v278 = vld [vmem:[%s188 + $0x78] sm:$0xff]
      %v279 = vld [vmem:[%s188 + $0x80] sm:$0xff]
      %v280 = vld [vmem:[%s188 + $0x88] sm:$0xff]
      %v281 = vld [vmem:[%s188 + $0x90] sm:$0xff]
      %v282 = vld [vmem:[%s188 + $0x98] sm:$0xff]
      %v283 = vld [vmem:[%s188 + $0xa0] sm:$0xff]
      %v284 = vld [vmem:[%s188 + $0xa8] sm:$0xff]
      %v285 = vld [vmem:[%s188 + $0xb0] sm:$0xff]
      %v286 = vld [vmem:[%s188 + $0xb8] sm:$0xff]
      %v287 = vld [vmem:[%s188 + $0xc0] sm:$0xff]
      %v288 = vld [vmem:[%s188 + $0xc8] sm:$0xff]
      %v289 = vld [vmem:[%s188 + $0xd0] sm:$0xff]
      %v290 = vld [vmem:[%s188 + $0xd8] sm:$0xff]
      %v291 = vld [vmem:[%s188 + $0xe0] sm:$0xff]
      %v292 = vld [vmem:[%s188 + $0xe8] sm:$0xff]
      %v293 = vld [vmem:[%s188 + $0xf0] sm:$0xff]
      %v294 = vld [vmem:[%s188 + $0xf8] sm:$0xff]
      %v295 = vld [vmem:[%s188 + $0x100] sm:$0xff]
      %v296 = vld [vmem:[%s188 + $0x108] sm:$0xff]
      %v297 = vld [vmem:[%s188 + $0x110] sm:$0xff]
      %v298 = vld [vmem:[%s188 + $0x118] sm:$0xff]
      %v299 = vld [vmem:[%s188 + $0x120] sm:$0xff]
      %v300 = vld [vmem:[%s188 + $0x128] sm:$0xff]
      %v301 = vld [vmem:[%s188 + $0x130] sm:$0xff]
      %v302 = vld [vmem:[%s188 + $0x138] sm:$0xff]
      %v303 = vld [vmem:[%s188 + $0x140] sm:$0xff]
      %v304 = vld [vmem:[%s188 + $0x148] sm:$0xff]
      %v305 = vld [vmem:[%s188 + $0x150] sm:$0xff]
      %v306 = vld [vmem:[%s188 + $0x158] sm:$0xff]
      %v307 = vld [vmem:[%s188 + $0x160] sm:$0xff]
      %v308 = vld [vmem:[%s188 + $0x168] sm:$0xff]
      %v309 = vld [vmem:[%s188 + $0x170] sm:$0xff]
      %v310 = vld [vmem:[%s188 + $0x178] sm:$0xff]
      %v311 = vld [vmem:[%s188 + $0x180] sm:$0xff]
      %v312 = vld [vmem:[%s188 + $0x188] sm:$0xff]
      %v313 = vld [vmem:[%s188 + $0x190] sm:$0xff]
      %v314 = vld [vmem:[%s188 + $0x198] sm:$0xff]
      %v315 = vld [vmem:[%s188 + $0x1a0] sm:$0xff]
      %v316 = vld [vmem:[%s188 + $0x1a8] sm:$0xff]
      %v317 = vld [vmem:[%s188 + $0x1b0] sm:$0xff]
      %v318 = vld [vmem:[%s188 + $0x1b8] sm:$0xff]
      %v319 = vld [vmem:[%s188 + $0x1c0] sm:$0xff]
      %v320 = vld [vmem:[%s188 + $0x1c8] sm:$0xff]
      %v321 = vld [vmem:[%s188 + $0x1d0] sm:$0xff]
      %v322 = vld [vmem:[%s188 + $0x1d8] sm:$0xff]
      %v323 = vld [vmem:[%s188 + $0x1e0] sm:$0xff]
      %v324 = vld [vmem:[%s188 + $0x1e8] sm:$0xff]
      %v325 = vld [vmem:[%s188 + $0x1f0] sm:$0xff]
      %v326 = vld [vmem:[%s188 + $0x1f8] sm:$0xff]
      %v327 = vld [vmem:[#allocation2] sm:$0xff]
      %v328 = vld [vmem:[#allocation2 + $0x8] sm:$0xff]
      %v329 = vld [vmem:[#allocation2 + $0x10] sm:$0xff]
      %v330 = vld [vmem:[#allocation2 + $0x18] sm:$0xff]
      %v331 = vld [vmem:[#allocation2 + $0x20] sm:$0xff]
      %v332 = vld [vmem:[#allocation2 + $0x28] sm:$0xff]
      %v333 = vld [vmem:[#allocation2 + $0x30] sm:$0xff]
      %v334 = vld [vmem:[#allocation2 + $0x38] sm:$0xff]
      %v335 = vld [vmem:[#allocation2 + $0x40] sm:$0xff]
      %v336 = vld [vmem:[#allocation2 + $0x48] sm:$0xff]
      %v337 = vld [vmem:[#allocation2 + $0x50] sm:$0xff]
      %v338 = vld [vmem:[#allocation2 + $0x58] sm:$0xff]
      %v339 = vld [vmem:[#allocation2 + $0x60] sm:$0xff]
      %v340 = vld [vmem:[#allocation2 + $0x68] sm:$0xff]
      %v341 = vld [vmem:[#allocation2 + $0x70] sm:$0xff]
      %v342 = vld [vmem:[#allocation2 + $0x78] sm:$0xff]
      %v343 = vld [vmem:[#allocation2 + $0x80] sm:$0xff]
      %v344 = vld [vmem:[#allocation2 + $0x88] sm:$0xff]
      %v345 = vld [vmem:[#allocation2 + $0x90] sm:$0xff]
      %v346 = vld [vmem:[#allocation2 + $0x98] sm:$0xff]
      %v347 = vld [vmem:[#allocation2 + $0xa0] sm:$0xff]
      %v348 = vld [vmem:[#allocation2 + $0xa8] sm:$0xff]
      %v349 = vld [vmem:[#allocation2 + $0xb0] sm:$0xff]
      %v350 = vld [vmem:[#allocation2 + $0xb8] sm:$0xff]
      %v351 = vld [vmem:[#allocation2 + $0xc0] sm:$0xff]
      %v352 = vld [vmem:[#allocation2 + $0xc8] sm:$0xff]
      %v353 = vld [vmem:[#allocation2 + $0xd0] sm:$0xff]
      %v354 = vld [vmem:[#allocation2 + $0xd8] sm:$0xff]
      %v355 = vld [vmem:[#allocation2 + $0xe0] sm:$0xff]
      %v356 = vld [vmem:[#allocation2 + $0xe8] sm:$0xff]
      %v357 = vld [vmem:[#allocation2 + $0xf0] sm:$0xff]
      %v358 = vld [vmem:[#allocation2 + $0xf8] sm:$0xff]
      %v359 = vld [vmem:[#allocation2 + $0x100] sm:$0xff]
      %v360 = vld [vmem:[#allocation2 + $0x108] sm:$0xff]
      %v361 = vld [vmem:[#allocation2 + $0x110] sm:$0xff]
      %v362 = vld [vmem:[#allocation2 + $0x118] sm:$0xff]
      %v363 = vld [vmem:[#allocation2 + $0x120] sm:$0xff]
      %v364 = vld [vmem:[#allocation2 + $0x128] sm:$0xff]
      %v365 = vld [vmem:[#allocation2 + $0x130] sm:$0xff]
      %v366 = vld [vmem:[#allocation2 + $0x138] sm:$0xff]
      %v367 = vld [vmem:[#allocation2 + $0x140] sm:$0xff]
      %v368 = vld [vmem:[#allocation2 + $0x148] sm:$0xff]
      %v369 = vld [vmem:[#allocation2 + $0x150] sm:$0xff]
      %v370 = vld [vmem:[#allocation2 + $0x158] sm:$0xff]
      %v371 = vld [vmem:[#allocation2 + $0x160] sm:$0xff]
      %v372 = vld [vmem:[#allocation2 + $0x168] sm:$0xff]
      %v373 = vld [vmem:[#allocation2 + $0x170] sm:$0xff]
      %v374 = vld [vmem:[#allocation2 + $0x178] sm:$0xff]
      %v375 = vld [vmem:[#allocation2 + $0x180] sm:$0xff]
      %v376 = vld [vmem:[#allocation2 + $0x188] sm:$0xff]
      %v377 = vld [vmem:[#allocation2 + $0x190] sm:$0xff]
      %v378 = vld [vmem:[#allocation2 + $0x198] sm:$0xff]
      %v379 = vld [vmem:[#allocation2 + $0x1a0] sm:$0xff]
      %v380 = vld [vmem:[#allocation2 + $0x1a8] sm:$0xff]
      %v381 = vld [vmem:[#allocation2 + $0x1b0] sm:$0xff]
      %v382 = vld [vmem:[#allocation2 + $0x1b8] sm:$0xff]
      %v383 = vld [vmem:[#allocation2 + $0x1c0] sm:$0xff]
      %v384 = vld [vmem:[#allocation2 + $0x1c8] sm:$0xff]
      %v385 = vld [vmem:[#allocation2 + $0x1d0] sm:$0xff]
      %v386 = vld [vmem:[#allocation2 + $0x1d8] sm:$0xff]
      %v387 = vld [vmem:[#allocation2 + $0x1e0] sm:$0xff]
      %v388 = vld [vmem:[#allocation2 + $0x1e8] sm:$0xff]
      %v389 = vld [vmem:[#allocation2 + $0x1f0] sm:$0xff]
      %v390 = vld [vmem:[#allocation2 + $0x1f8] sm:$0xff]
      %vm391 = vcmask 523264
      %v392 = vsel %vm391, %v263, 0.0
      %393 = vadd.xlane.f32.xlu0 %v392
      %v394 = vpop.xlane.xlu0 %393
      %v395 = vsel %vm391, %v264, 0.0
      %396 = vadd.xlane.f32.xlu0 %v395
      %v397 = vpop.xlane.xlu0 %396
      %v398 = vsel %vm391, %v265, 0.0
      %399 = vadd.xlane.f32.xlu0 %v398
      %v400 = vpop.xlane.xlu0 %399
      %v401 = vsel %vm391, %v266, 0.0
      %402 = vadd.xlane.f32.xlu0 %v401
      %v403 = vpop.xlane.xlu0 %402
      %v404 = vsel %vm391, %v267, 0.0
      %405 = vadd.xlane.f32.xlu0 %v404
      %v406 = vpop.xlane.xlu0 %405
      %v407 = vsel %vm391, %v268, 0.0
      %408 = vadd.xlane.f32.xlu0 %v407
      %v409 = vpop.xlane.xlu0 %408
      %v410 = vsel %vm391, %v269, 0.0
      %411 = vadd.xlane.f32.xlu0 %v410
      %v412 = vpop.xlane.xlu0 %411
      %v413 = vsel %vm391, %v270, 0.0
      %414 = vadd.xlane.f32.xlu0 %v413
      %v415 = vpop.xlane.xlu0 %414
      %v416 = vsel %vm391, %v271, 0.0
      %417 = vadd.xlane.f32.xlu0 %v416
      %v418 = vpop.xlane.xlu0 %417
      %v419 = vsel %vm391, %v272, 0.0
      %420 = vadd.xlane.f32.xlu0 %v419
      %v421 = vpop.xlane.xlu0 %420
      %v422 = vsel %vm391, %v273, 0.0
      %423 = vadd.xlane.f32.xlu0 %v422
      %v424 = vpop.xlane.xlu0 %423
      %v425 = vsel %vm391, %v274, 0.0
      %426 = vadd.xlane.f32.xlu0 %v425
      %v427 = vpop.xlane.xlu0 %426
      %v428 = vsel %vm391, %v275, 0.0
      %429 = vadd.xlane.f32.xlu0 %v428
      %v430 = vpop.xlane.xlu0 %429
      %v431 = vsel %vm391, %v276, 0.0
      %432 = vadd.xlane.f32.xlu0 %v431
      %v433 = vpop.xlane.xlu0 %432
      %v434 = vsel %vm391, %v277, 0.0
      %435 = vadd.xlane.f32.xlu0 %v434
      %v436 = vpop.xlane.xlu0 %435
      %v437 = vsel %vm391, %v278, 0.0
      %438 = vadd.xlane.f32.xlu0 %v437
      %v439 = vpop.xlane.xlu0 %438
      %v440 = vsel %vm391, %v279, 0.0
      %441 = vadd.xlane.f32.xlu0 %v440
      %v442 = vpop.xlane.xlu0 %441
      %v443 = vsel %vm391, %v280, 0.0
      %444 = vadd.xlane.f32.xlu0 %v443
      %v445 = vpop.xlane.xlu0 %444
      %v446 = vsel %vm391, %v281, 0.0
      %447 = vadd.xlane.f32.xlu0 %v446
      %v448 = vpop.xlane.xlu0 %447
      %v449 = vsel %vm391, %v282, 0.0
      %450 = vadd.xlane.f32.xlu0 %v449
      %v451 = vpop.xlane.xlu0 %450
      %v452 = vsel %vm391, %v283, 0.0
      %453 = vadd.xlane.f32.xlu0 %v452
      %v454 = vpop.xlane.xlu0 %453
      %v455 = vsel %vm391, %v284, 0.0
      %456 = vadd.xlane.f32.xlu0 %v455
      %v457 = vpop.xlane.xlu0 %456
      %v458 = vsel %vm391, %v285, 0.0
      %459 = vadd.xlane.f32.xlu0 %v458
      %v460 = vpop.xlane.xlu0 %459
      %v461 = vsel %vm391, %v286, 0.0
      %462 = vadd.xlane.f32.xlu0 %v461
      %v463 = vpop.xlane.xlu0 %462
      %v464 = vsel %vm391, %v287, 0.0
      %465 = vadd.xlane.f32.xlu0 %v464
      %v466 = vpop.xlane.xlu0 %465
      %v467 = vsel %vm391, %v288, 0.0
      %468 = vadd.xlane.f32.xlu0 %v467
      %v469 = vpop.xlane.xlu0 %468
      %v470 = vsel %vm391, %v289, 0.0
      %471 = vadd.xlane.f32.xlu0 %v470
      %v472 = vpop.xlane.xlu0 %471
      %v473 = vsel %vm391, %v290, 0.0
      %474 = vadd.xlane.f32.xlu0 %v473
      %v475 = vpop.xlane.xlu0 %474
      %v476 = vsel %vm391, %v291, 0.0
      %477 = vadd.xlane.f32.xlu0 %v476
      %v478 = vpop.xlane.xlu0 %477
      %v479 = vsel %vm391, %v292, 0.0
      %480 = vadd.xlane.f32.xlu0 %v479
      %v481 = vpop.xlane.xlu0 %480
      %v482 = vsel %vm391, %v293, 0.0
      %483 = vadd.xlane.f32.xlu0 %v482
      %v484 = vpop.xlane.xlu0 %483
      %v485 = vsel %vm391, %v294, 0.0
      %486 = vadd.xlane.f32.xlu0 %v485
      %v487 = vpop.xlane.xlu0 %486
      %v488 = vsel %vm391, %v295, 0.0
      %489 = vadd.xlane.f32.xlu0 %v488
      %v490 = vpop.xlane.xlu0 %489
      %v491 = vsel %vm391, %v296, 0.0
      %492 = vadd.xlane.f32.xlu0 %v491
      %v493 = vpop.xlane.xlu0 %492
      %v494 = vsel %vm391, %v297, 0.0
      %495 = vadd.xlane.f32.xlu0 %v494
      %v496 = vpop.xlane.xlu0 %495
      %v497 = vsel %vm391, %v298, 0.0
      %498 = vadd.xlane.f32.xlu0 %v497
      %v499 = vpop.xlane.xlu0 %498
      %v500 = vsel %vm391, %v299, 0.0
      %501 = vadd.xlane.f32.xlu0 %v500
      %v502 = vpop.xlane.xlu0 %501
      %v503 = vsel %vm391, %v300, 0.0
      %504 = vadd.xlane.f32.xlu0 %v503
      %v505 = vpop.xlane.xlu0 %504
      %v506 = vsel %vm391, %v301, 0.0
      %507 = vadd.xlane.f32.xlu0 %v506
      %v508 = vpop.xlane.xlu0 %507
      %v509 = vsel %vm391, %v302, 0.0
      %510 = vadd.xlane.f32.xlu0 %v509
      %v511 = vpop.xlane.xlu0 %510
      %v512 = vsel %vm391, %v303, 0.0
      %513 = vadd.xlane.f32.xlu0 %v512
      %v514 = vpop.xlane.xlu0 %513
      %v515 = vsel %vm391, %v304, 0.0
      %516 = vadd.xlane.f32.xlu0 %v515
      %v517 = vpop.xlane.xlu0 %516
      %v518 = vsel %vm391, %v305, 0.0
      %519 = vadd.xlane.f32.xlu0 %v518
      %v520 = vpop.xlane.xlu0 %519
      %v521 = vsel %vm391, %v306, 0.0
      %522 = vadd.xlane.f32.xlu0 %v521
      %v523 = vpop.xlane.xlu0 %522
      %v524 = vsel %vm391, %v307, 0.0
      %525 = vadd.xlane.f32.xlu0 %v524
      %v526 = vpop.xlane.xlu0 %525
      %v527 = vsel %vm391, %v308, 0.0
      %528 = vadd.xlane.f32.xlu0 %v527
      %v529 = vpop.xlane.xlu0 %528
      %v530 = vsel %vm391, %v309, 0.0
      %531 = vadd.xlane.f32.xlu0 %v530
      %v532 = vpop.xlane.xlu0 %531
      %v533 = vsel %vm391, %v310, 0.0
      %534 = vadd.xlane.f32.xlu0 %v533
      %v535 = vpop.xlane.xlu0 %534
      %v536 = vsel %vm391, %v311, 0.0
      %537 = vadd.xlane.f32.xlu0 %v536
      %v538 = vpop.xlane.xlu0 %537
      %v539 = vsel %vm391, %v312, 0.0
      %540 = vadd.xlane.f32.xlu0 %v539
      %v541 = vpop.xlane.xlu0 %540
      %v542 = vsel %vm391, %v313, 0.0
      %543 = vadd.xlane.f32.xlu0 %v542
      %v544 = vpop.xlane.xlu0 %543
      %v545 = vsel %vm391, %v314, 0.0
      %546 = vadd.xlane.f32.xlu0 %v545
      %v547 = vpop.xlane.xlu0 %546
      %v548 = vsel %vm391, %v315, 0.0
      %549 = vadd.xlane.f32.xlu0 %v548
      %v550 = vpop.xlane.xlu0 %549
      %v551 = vsel %vm391, %v316, 0.0
      %552 = vadd.xlane.f32.xlu0 %v551
      %v553 = vpop.xlane.xlu0 %552
      %v554 = vsel %vm391, %v317, 0.0
      %555 = vadd.xlane.f32.xlu0 %v554
      %v556 = vpop.xlane.xlu0 %555
      %v557 = vsel %vm391, %v318, 0.0
      %558 = vadd.xlane.f32.xlu0 %v557
      %v559 = vpop.xlane.xlu0 %558
      %v560 = vsel %vm391, %v319, 0.0
      %561 = vadd.xlane.f32.xlu0 %v560
      %v562 = vpop.xlane.xlu0 %561
      %v563 = vsel %vm391, %v320, 0.0
      %564 = vadd.xlane.f32.xlu0 %v563
      %v565 = vpop.xlane.xlu0 %564
      %v566 = vsel %vm391, %v321, 0.0
      %567 = vadd.xlane.f32.xlu0 %v566
      %v568 = vpop.xlane.xlu0 %567
      %v569 = vsel %vm391, %v322, 0.0
      %570 = vadd.xlane.f32.xlu0 %v569
      %v571 = vpop.xlane.xlu0 %570
      %v572 = vsel %vm391, %v323, 0.0
      %573 = vadd.xlane.f32.xlu0 %v572
      %v574 = vpop.xlane.xlu0 %573
      %v575 = vsel %vm391, %v324, 0.0
      %576 = vadd.xlane.f32.xlu0 %v575
      %v577 = vpop.xlane.xlu0 %576
      %v578 = vsel %vm391, %v325, 0.0
      %579 = vadd.xlane.f32.xlu0 %v578
      %v580 = vpop.xlane.xlu0 %579
      %v581 = vsel %vm391, %v326, 0.0
      %582 = vadd.xlane.f32.xlu0 %v581
      %v583 = vpop.xlane.xlu0 %582
      %v584 = vadd.f32 %v327, %v394
      %v585 = vadd.f32 %v328, %v397
      %v586 = vadd.f32 %v329, %v400
      %v587 = vadd.f32 %v330, %v403
      %v588 = vadd.f32 %v331, %v406
      %v589 = vadd.f32 %v332, %v409
      %v590 = vadd.f32 %v333, %v412
      %v591 = vadd.f32 %v334, %v415
      %v592 = vadd.f32 %v335, %v418
      %v593 = vadd.f32 %v336, %v421
      %v594 = vadd.f32 %v337, %v424
      %v595 = vadd.f32 %v338, %v427
      %v596 = vadd.f32 %v339, %v430
      %v597 = vadd.f32 %v340, %v433
      %v598 = vadd.f32 %v341, %v436
      %v599 = vadd.f32 %v342, %v439
      %v600 = vadd.f32 %v343, %v442
      %v601 = vadd.f32 %v344, %v445
      %v602 = vadd.f32 %v345, %v448
      %v603 = vadd.f32 %v346, %v451
      %v604 = vadd.f32 %v347, %v454
      %v605 = vadd.f32 %v348, %v457
      %v606 = vadd.f32 %v349, %v460
      %v607 = vadd.f32 %v350, %v463
      %v608 = vadd.f32 %v351, %v466
      %v609 = vadd.f32 %v352, %v469
      %v610 = vadd.f32 %v353, %v472
      %v611 = vadd.f32 %v354, %v475
      %v612 = vadd.f32 %v355, %v478
      %v613 = vadd.f32 %v356, %v481
      %v614 = vadd.f32 %v357, %v484
      %v615 = vadd.f32 %v358, %v487
      %v616 = vadd.f32 %v359, %v490
      %v617 = vadd.f32 %v360, %v493
      %v618 = vadd.f32 %v361, %v496
      %v619 = vadd.f32 %v362, %v499
      %v620 = vadd.f32 %v363, %v502
      %v621 = vadd.f32 %v364, %v505
      %v622 = vadd.f32 %v365, %v508
      %v623 = vadd.f32 %v366, %v511
      %v624 = vadd.f32 %v367, %v514
      %v625 = vadd.f32 %v368, %v517
      %v626 = vadd.f32 %v369, %v520
      %v627 = vadd.f32 %v370, %v523
      %v628 = vadd.f32 %v371, %v526
      %v629 = vadd.f32 %v372, %v529
      %v630 = vadd.f32 %v373, %v532
      %v631 = vadd.f32 %v374, %v535
      %v632 = vadd.f32 %v375, %v538
      %v633 = vadd.f32 %v376, %v541
      %v634 = vadd.f32 %v377, %v544
      %v635 = vadd.f32 %v378, %v547
      %v636 = vadd.f32 %v379, %v550
      %v637 = vadd.f32 %v380, %v553
      %v638 = vadd.f32 %v381, %v556
      %v639 = vadd.f32 %v382, %v559
      %v640 = vadd.f32 %v383, %v562
      %v641 = vadd.f32 %v384, %v565
      %v642 = vadd.f32 %v385, %v568
      %v643 = vadd.f32 %v386, %v571
      %v644 = vadd.f32 %v387, %v574
      %v645 = vadd.f32 %v388, %v577
      %v646 = vadd.f32 %v389, %v580
      %v647 = vadd.f32 %v390, %v583
      %vm648 = vcmask 7168
      %649 = vst.msk [vmem:[#allocation2] sm:$0xff] %vm648, %v584
      %650 = vst.msk [vmem:[#allocation2 + $0x8] sm:$0xff] %vm648, %v585
      %651 = vst.msk [vmem:[#allocation2 + $0x10] sm:$0xff] %vm648, %v586
      %652 = vst.msk [vmem:[#allocation2 + $0x18] sm:$0xff] %vm648, %v587
      %653 = vst.msk [vmem:[#allocation2 + $0x20] sm:$0xff] %vm648, %v588
      %654 = vst.msk [vmem:[#allocation2 + $0x28] sm:$0xff] %vm648, %v589
      %655 = vst.msk [vmem:[#allocation2 + $0x30] sm:$0xff] %vm648, %v590
      %656 = vst.msk [vmem:[#allocation2 + $0x38] sm:$0xff] %vm648, %v591
      %657 = vst.msk [vmem:[#allocation2 + $0x40] sm:$0xff] %vm648, %v592
      %658 = vst.msk [vmem:[#allocation2 + $0x48] sm:$0xff] %vm648, %v593
      %659 = vst.msk [vmem:[#allocation2 + $0x50] sm:$0xff] %vm648, %v594
      %660 = vst.msk [vmem:[#allocation2 + $0x58] sm:$0xff] %vm648, %v595
      %661 = vst.msk [vmem:[#allocation2 + $0x60] sm:$0xff] %vm648, %v596
      %662 = vst.msk [vmem:[#allocation2 + $0x68] sm:$0xff] %vm648, %v597
      %663 = vst.msk [vmem:[#allocation2 + $0x70] sm:$0xff] %vm648, %v598
      %664 = vst.msk [vmem:[#allocation2 + $0x78] sm:$0xff] %vm648, %v599
      %665 = vst.msk [vmem:[#allocation2 + $0x80] sm:$0xff] %vm648, %v600
      %666 = vst.msk [vmem:[#allocation2 + $0x88] sm:$0xff] %vm648, %v601
      %667 = vst.msk [vmem:[#allocation2 + $0x90] sm:$0xff] %vm648, %v602
      %668 = vst.msk [vmem:[#allocation2 + $0x98] sm:$0xff] %vm648, %v603
      %669 = vst.msk [vmem:[#allocation2 + $0xa0] sm:$0xff] %vm648, %v604
      %670 = vst.msk [vmem:[#allocation2 + $0xa8] sm:$0xff] %vm648, %v605
      %671 = vst.msk [vmem:[#allocation2 + $0xb0] sm:$0xff] %vm648, %v606
      %672 = vst.msk [vmem:[#allocation2 + $0xb8] sm:$0xff] %vm648, %v607
      %673 = vst.msk [vmem:[#allocation2 + $0xc0] sm:$0xff] %vm648, %v608
      %674 = vst.msk [vmem:[#allocation2 + $0xc8] sm:$0xff] %vm648, %v609
      %675 = vst.msk [vmem:[#allocation2 + $0xd0] sm:$0xff] %vm648, %v610
      %676 = vst.msk [vmem:[#allocation2 + $0xd8] sm:$0xff] %vm648, %v611
      %677 = vst.msk [vmem:[#allocation2 + $0xe0] sm:$0xff] %vm648, %v612
      %678 = vst.msk [vmem:[#allocation2 + $0xe8] sm:$0xff] %vm648, %v613
      %679 = vst.msk [vmem:[#allocation2 + $0xf0] sm:$0xff] %vm648, %v614
      %680 = vst.msk [vmem:[#allocation2 + $0xf8] sm:$0xff] %vm648, %v615
      %681 = vst.msk [vmem:[#allocation2 + $0x100] sm:$0xff] %vm648, %v616
      %682 = vst.msk [vmem:[#allocation2 + $0x108] sm:$0xff] %vm648, %v617
      %683 = vst.msk [vmem:[#allocation2 + $0x110] sm:$0xff] %vm648, %v618
      %684 = vst.msk [vmem:[#allocation2 + $0x118] sm:$0xff] %vm648, %v619
      %685 = vst.msk [vmem:[#allocation2 + $0x120] sm:$0xff] %vm648, %v620
      %686 = vst.msk [vmem:[#allocation2 + $0x128] sm:$0xff] %vm648, %v621
      %687 = vst.msk [vmem:[#allocation2 + $0x130] sm:$0xff] %vm648, %v622
      %688 = vst.msk [vmem:[#allocation2 + $0x138] sm:$0xff] %vm648, %v623
      %689 = vst.msk [vmem:[#allocation2 + $0x140] sm:$0xff] %vm648, %v624
      %690 = vst.msk [vmem:[#allocation2 + $0x148] sm:$0xff] %vm648, %v625
      %691 = vst.msk [vmem:[#allocation2 + $0x150] sm:$0xff] %vm648, %v626
      %692 = vst.msk [vmem:[#allocation2 + $0x158] sm:$0xff] %vm648, %v627
      %693 = vst.msk [vmem:[#allocation2 + $0x160] sm:$0xff] %vm648, %v628
      %694 = vst.msk [vmem:[#allocation2 + $0x168] sm:$0xff] %vm648, %v629
      %695 = vst.msk [vmem:[#allocation2 + $0x170] sm:$0xff] %vm648, %v630
      %696 = vst.msk [vmem:[#allocation2 + $0x178] sm:$0xff] %vm648, %v631
      %697 = vst.msk [vmem:[#allocation2 + $0x180] sm:$0xff] %vm648, %v632
      %698 = vst.msk [vmem:[#allocation2 + $0x188] sm:$0xff] %vm648, %v633
      %699 = vst.msk [vmem:[#allocation2 + $0x190] sm:$0xff] %vm648, %v634
      %700 = vst.msk [vmem:[#allocation2 + $0x198] sm:$0xff] %vm648, %v635
      %701 = vst.msk [vmem:[#allocation2 + $0x1a0] sm:$0xff] %vm648, %v636
      %702 = vst.msk [vmem:[#allocation2 + $0x1a8] sm:$0xff] %vm648, %v637
      %703 = vst.msk [vmem:[#allocation2 + $0x1b0] sm:$0xff] %vm648, %v638
      %704 = vst.msk [vmem:[#allocation2 + $0x1b8] sm:$0xff] %vm648, %v639
      %705 = vst.msk [vmem:[#allocation2 + $0x1c0] sm:$0xff] %vm648, %v640
      %706 = vst.msk [vmem:[#allocation2 + $0x1c8] sm:$0xff] %vm648, %v641
      %707 = vst.msk [vmem:[#allocation2 + $0x1d0] sm:$0xff] %vm648, %v642
      %708 = vst.msk [vmem:[#allocation2 + $0x1d8] sm:$0xff] %vm648, %v643
      %709 = vst.msk [vmem:[#allocation2 + $0x1e0] sm:$0xff] %vm648, %v644
      %710 = vst.msk [vmem:[#allocation2 + $0x1e8] sm:$0xff] %vm648, %v645
      %711 = vst.msk [vmem:[#allocation2 + $0x1f0] sm:$0xff] %vm648, %v646
      %712 = vst.msk [vmem:[#allocation2 + $0x1f8] sm:$0xff] %vm648, %v647
      // Predicated region
      $region37: #{tpu_custom_call.1} parent=31 // pred_check
        %p713 = pneg %p194
      $region38: #{tpu_custom_call.1} parent=31 // pred_check_branch
        %715 = sbr.rel (%p713) target = $region40
      $region39: #{tpu_custom_call.1} parent=31 // pred_region
        %v716 = vld [vmem:[#allocation2] sm:$0xff]
        %v717 = vld [vmem:[#allocation2 + $0x8] sm:$0xff]
        %v718 = vld [vmem:[#allocation2 + $0x10] sm:$0xff]
        %v719 = vld [vmem:[#allocation2 + $0x18] sm:$0xff]
        %v720 = vld [vmem:[#allocation2 + $0x20] sm:$0xff]
        %v721 = vld [vmem:[#allocation2 + $0x28] sm:$0xff]
        %v722 = vld [vmem:[#allocation2 + $0x30] sm:$0xff]
        %v723 = vld [vmem:[#allocation2 + $0x38] sm:$0xff]
        %v724 = vld [vmem:[#allocation2 + $0x40] sm:$0xff]
        %v725 = vld [vmem:[#allocation2 + $0x48] sm:$0xff]
        %v726 = vld [vmem:[#allocation2 + $0x50] sm:$0xff]
        %v727 = vld [vmem:[#allocation2 + $0x58] sm:$0xff]
        %v728 = vld [vmem:[#allocation2 + $0x60] sm:$0xff]
        %v729 = vld [vmem:[#allocation2 + $0x68] sm:$0xff]
        %v730 = vld [vmem:[#allocation2 + $0x70] sm:$0xff]
        %v731 = vld [vmem:[#allocation2 + $0x78] sm:$0xff]
        %v732 = vld [vmem:[#allocation2 + $0x80] sm:$0xff]
        %v733 = vld [vmem:[#allocation2 + $0x88] sm:$0xff]
        %v734 = vld [vmem:[#allocation2 + $0x90] sm:$0xff]
        %v735 = vld [vmem:[#allocation2 + $0x98] sm:$0xff]
        %v736 = vld [vmem:[#allocation2 + $0xa0] sm:$0xff]
        %v737 = vld [vmem:[#allocation2 + $0xa8] sm:$0xff]
        %v738 = vld [vmem:[#allocation2 + $0xb0] sm:$0xff]
        %v739 = vld [vmem:[#allocation2 + $0xb8] sm:$0xff]
        %v740 = vld [vmem:[#allocation2 + $0xc0] sm:$0xff]
        %v741 = vld [vmem:[#allocation2 + $0xc8] sm:$0xff]
        %v742 = vld [vmem:[#allocation2 + $0xd0] sm:$0xff]
        %v743 = vld [vmem:[#allocation2 + $0xd8] sm:$0xff]
        %v744 = vld [vmem:[#allocation2 + $0xe0] sm:$0xff]
        %v745 = vld [vmem:[#allocation2 + $0xe8] sm:$0xff]
        %v746 = vld [vmem:[#allocation2 + $0xf0] sm:$0xff]
        %v747 = vld [vmem:[#allocation2 + $0xf8] sm:$0xff]
        %v748 = vld [vmem:[#allocation2 + $0x100] sm:$0xff]
        %v749 = vld [vmem:[#allocation2 + $0x108] sm:$0xff]
        %v750 = vld [vmem:[#allocation2 + $0x110] sm:$0xff]
        %v751 = vld [vmem:[#allocation2 + $0x118] sm:$0xff]
        %v752 = vld [vmem:[#allocation2 + $0x120] sm:$0xff]
        %v753 = vld [vmem:[#allocation2 + $0x128] sm:$0xff]
        %v754 = vld [vmem:[#allocation2 + $0x130] sm:$0xff]
        %v755 = vld [vmem:[#allocation2 + $0x138] sm:$0xff]
        %v756 = vld [vmem:[#allocation2 + $0x140] sm:$0xff]
        %v757 = vld [vmem:[#allocation2 + $0x148] sm:$0xff]
        %v758 = vld [vmem:[#allocation2 + $0x150] sm:$0xff]
        %v759 = vld [vmem:[#allocation2 + $0x158] sm:$0xff]
        %v760 = vld [vmem:[#allocation2 + $0x160] sm:$0xff]
        %v761 = vld [vmem:[#allocation2 + $0x168] sm:$0xff]
        %v762 = vld [vmem:[#allocation2 + $0x170] sm:$0xff]
        %v763 = vld [vmem:[#allocation2 + $0x178] sm:$0xff]
        %v764 = vld [vmem:[#allocation2 + $0x180] sm:$0xff]
        %v765 = vld [vmem:[#allocation2 + $0x188] sm:$0xff]
        %v766 = vld [vmem:[#allocation2 + $0x190] sm:$0xff]
        %v767 = vld [vmem:[#allocation2 + $0x198] sm:$0xff]
        %v768 = vld [vmem:[#allocation2 + $0x1a0] sm:$0xff]
        %v769 = vld [vmem:[#allocation2 + $0x1a8] sm:$0xff]
        %v770 = vld [vmem:[#allocation2 + $0x1b0] sm:$0xff]
        %v771 = vld [vmem:[#allocation2 + $0x1b8] sm:$0xff]
        %v772 = vld [vmem:[#allocation2 + $0x1c0] sm:$0xff]
        %v773 = vld [vmem:[#allocation2 + $0x1c8] sm:$0xff]
        %v774 = vld [vmem:[#allocation2 + $0x1d0] sm:$0xff]
        %v775 = vld [vmem:[#allocation2 + $0x1d8] sm:$0xff]
        %v776 = vld [vmem:[#allocation2 + $0x1e0] sm:$0xff]
        %v777 = vld [vmem:[#allocation2 + $0x1e8] sm:$0xff]
        %v778 = vld [vmem:[#allocation2 + $0x1f0] sm:$0xff]
        %v779 = vld [vmem:[#allocation2 + $0x1f8] sm:$0xff]
        %v780 = vmul.f32 %v716, 0.015625
        %v781 = vmul.f32 %v717, 0.015625
        %v782 = vmul.f32 %v718, 0.015625
        %v783 = vmul.f32 %v719, 0.015625
        %v784 = vmul.f32 %v720, 0.015625
        %v785 = vmul.f32 %v721, 0.015625
        %v786 = vmul.f32 %v722, 0.015625
        %v787 = vmul.f32 %v723, 0.015625
        %v788 = vmul.f32 %v724, 0.015625
        %v789 = vmul.f32 %v725, 0.015625
        %v790 = vmul.f32 %v726, 0.015625
        %v791 = vmul.f32 %v727, 0.015625
        %v792 = vmul.f32 %v728, 0.015625
        %v793 = vmul.f32 %v729, 0.015625
        %v794 = vmul.f32 %v730, 0.015625
        %v795 = vmul.f32 %v731, 0.015625
        %v796 = vmul.f32 %v732, 0.015625
        %v797 = vmul.f32 %v733, 0.015625
        %v798 = vmul.f32 %v734, 0.015625
        %v799 = vmul.f32 %v735, 0.015625
        %v800 = vmul.f32 %v736, 0.015625
        %v801 = vmul.f32 %v737, 0.015625
        %v802 = vmul.f32 %v738, 0.015625
        %v803 = vmul.f32 %v739, 0.015625
        %v804 = vmul.f32 %v740, 0.015625
        %v805 = vmul.f32 %v741, 0.015625
        %v806 = vmul.f32 %v742, 0.015625
        %v807 = vmul.f32 %v743, 0.015625
        %v808 = vmul.f32 %v744, 0.015625
        %v809 = vmul.f32 %v745, 0.015625
        %v810 = vmul.f32 %v746, 0.015625
        %v811 = vmul.f32 %v747, 0.015625
        %v812 = vmul.f32 %v748, 0.015625
        %v813 = vmul.f32 %v749, 0.015625
        %v814 = vmul.f32 %v750, 0.015625
        %v815 = vmul.f32 %v751, 0.015625
        %v816 = vmul.f32 %v752, 0.015625
        %v817 = vmul.f32 %v753, 0.015625
        %v818 = vmul.f32 %v754, 0.015625
        %v819 = vmul.f32 %v755, 0.015625
        %v820 = vmul.f32 %v756, 0.015625
        %v821 = vmul.f32 %v757, 0.015625
        %v822 = vmul.f32 %v758, 0.015625
        %v823 = vmul.f32 %v759, 0.015625
        %v824 = vmul.f32 %v760, 0.015625
        %v825 = vmul.f32 %v761, 0.015625
        %v826 = vmul.f32 %v762, 0.015625
        %v827 = vmul.f32 %v763, 0.015625
        %v828 = vmul.f32 %v764, 0.015625
        %v829 = vmul.f32 %v765, 0.015625
        %v830 = vmul.f32 %v766, 0.015625
        %v831 = vmul.f32 %v767, 0.015625
        %v832 = vmul.f32 %v768, 0.015625
        %v833 = vmul.f32 %v769, 0.015625
        %v834 = vmul.f32 %v770, 0.015625
        %v835 = vmul.f32 %v771, 0.015625
        %v836 = vmul.f32 %v772, 0.015625
        %v837 = vmul.f32 %v773, 0.015625
        %v838 = vmul.f32 %v774, 0.015625
        %v839 = vmul.f32 %v775, 0.015625
        %v840 = vmul.f32 %v776, 0.015625
        %v841 = vmul.f32 %v777, 0.015625
        %v842 = vmul.f32 %v778, 0.015625
        %v843 = vmul.f32 %v779, 0.015625
        %v844 = vld [vmem:[%s1] sm:$0xff]
        %v845 = vld [vmem:[%s1 + $0x8] sm:$0xff]
        %v846 = vld [vmem:[%s1 + $0x10] sm:$0xff]
        %v847 = vld [vmem:[%s1 + $0x18] sm:$0xff]
        %v848 = vld [vmem:[%s1 + $0x20] sm:$0xff]
        %v849 = vld [vmem:[%s1 + $0x28] sm:$0xff]
        %v850 = vld [vmem:[%s1 + $0x30] sm:$0xff]
        %v851 = vld [vmem:[%s1 + $0x38] sm:$0xff]
        %v852 = vld [vmem:[%s1 + $0x40] sm:$0xff]
        %v853 = vld [vmem:[%s1 + $0x48] sm:$0xff]
        %v854 = vld [vmem:[%s1 + $0x50] sm:$0xff]
        %v855 = vld [vmem:[%s1 + $0x58] sm:$0xff]
        %v856 = vld [vmem:[%s1 + $0x60] sm:$0xff]
        %v857 = vld [vmem:[%s1 + $0x68] sm:$0xff]
        %v858 = vld [vmem:[%s1 + $0x70] sm:$0xff]
        %v859 = vld [vmem:[%s1 + $0x78] sm:$0xff]
        %v860 = vld [vmem:[%s2] sm:$0xff]
        %v861 = vld [vmem:[%s2 + $0x8] sm:$0xff]
        %v862 = vld [vmem:[%s2 + $0x10] sm:$0xff]
        %v863 = vld [vmem:[%s2 + $0x18] sm:$0xff]
        %864 = vmatprep.subr.mxu0 0.0
        %865 = vmatpush1.msra.mxu0 %v780
        %866 = vmatprep.subr.mxu0 0.0
        %867 = vmatpush1.msra.mxu0 %v781
        %868 = vmatprep.subr.mxu0 0.0
        %869 = vmatpush1.msra.mxu0 %v782
        %870 = vmatprep.subr.mxu0 0.0
        %871 = vmatpush1.msra.mxu0 %v783
        %872 = vmatprep.subr.mxu0 0.0
        %873 = vmatpush1.msra.mxu0 %v784
        %874 = vmatprep.subr.mxu0 0.0
        %875 = vmatpush1.msra.mxu0 %v785
        %876 = vmatprep.subr.mxu0 0.0
        %877 = vmatpush1.msra.mxu0 %v786
        %878 = vmatprep.subr.mxu0 0.0
        %879 = vmatpush1.msra.mxu0 %v787
        %880 = vmatprep.subr.mxu0 0.0
        %881 = vmatpush1.msra.mxu0 %v788
        %882 = vmatprep.subr.mxu0 0.0
        %883 = vmatpush1.msra.mxu0 %v789
        %884 = vmatprep.subr.mxu0 0.0
        %885 = vmatpush1.msra.mxu0 %v790
        %886 = vmatprep.subr.mxu0 0.0
        %887 = vmatpush1.msra.mxu0 %v791
        %888 = vmatprep.subr.mxu0 0.0
        %889 = vmatpush1.msra.mxu0 %v792
        %890 = vmatprep.subr.mxu0 0.0
        %891 = vmatpush1.msra.mxu0 %v793
        %892 = vmatprep.subr.mxu0 0.0
        %893 = vmatpush1.msra.mxu0 %v794
        %894 = vmatprep.subr.mxu0 0.0
        %895 = vmatpush1.msra.mxu0 %v795
        %896 = vmatprep.subr.mxu0 0.0
        %897 = vmatpush1.msra.mxu0 %v796
        %898 = vmatprep.subr.mxu0 0.0
        %899 = vmatpush1.msra.mxu0 %v797
        %900 = vmatprep.subr.mxu0 0.0
        %901 = vmatpush1.msra.mxu0 %v798
        %902 = vmatprep.subr.mxu0 0.0
        %903 = vmatpush1.msra.mxu0 %v799
        %904 = vmatprep.subr.mxu0 0.0
        %905 = vmatpush1.msra.mxu0 %v800
        %906 = vmatprep.subr.mxu0 0.0
        %907 = vmatpush1.msra.mxu0 %v801
        %908 = vmatprep.subr.mxu0 0.0
        %909 = vmatpush1.msra.mxu0 %v802
        %910 = vmatprep.subr.mxu0 0.0
        %911 = vmatpush1.msra.mxu0 %v803
        %912 = vmatprep.subr.mxu0 0.0
        %913 = vmatpush1.msra.mxu0 %v804
        %914 = vmatprep.subr.mxu0 0.0
        %915 = vmatpush1.msra.mxu0 %v805
        %916 = vmatprep.subr.mxu0 0.0
        %917 = vmatpush1.msra.mxu0 %v806
        %918 = vmatprep.subr.mxu0 0.0
        %919 = vmatpush1.msra.mxu0 %v807
        %920 = vmatprep.subr.mxu0 0.0
        %921 = vmatpush1.msra.mxu0 %v808
        %922 = vmatprep.subr.mxu0 0.0
        %923 = vmatpush1.msra.mxu0 %v809
        %924 = vmatprep.subr.mxu0 0.0
        %925 = vmatpush1.msra.mxu0 %v810
        %926 = vmatprep.subr.mxu0 0.0
        %927 = vmatpush1.msra.mxu0 %v811
        %928 = vmatprep.mubr.f32.mxu0 %v845
        %929 = vmatmul.mubr.f32.gmra.mrb[0].mxu0 %v844
        %v930 = vpop.f32.mrb[0].mxu0
        %v931 = vadd.f32 %v860, %v930
        %v932 = vpop.f32.mrb[0].mxu0
        %933 = vmatprep.mubr.f32.mxu0 %v849
        %934 = vmatmul.mubr.f32.gmra.mrb[0].mxu0 %v848
        %v935 = vpop.f32.mrb[0].mxu0
        %v936 = vadd.f32 %v861, %v935
        %v937 = vpop.f32.mrb[0].mxu0
        %938 = vmatprep.mubr.f32.mxu0 %v853
        %939 = vmatmul.mubr.f32.gmra.mrb[0].mxu0 %v852
        %v940 = vpop.f32.mrb[0].mxu0
        %v941 = vadd.f32 %v862, %v940
        %v942 = vpop.f32.mrb[0].mxu0
        %943 = vmatprep.mubr.f32.mxu0 %v857
        %944 = vmatmul.mubr.f32.gmra.mrb[0].mxu0 %v856
        %v945 = vpop.f32.mrb[0].mxu0
        %v946 = vadd.f32 %v863, %v945
        %v947 = vpop.f32.mrb[0].mxu0
        %948 = vdwg.mxu0
        %949 = vmatprep.subr.mxu0 0.0
        %950 = vmatpush1.msra.mxu0 %v812
        %951 = vmatprep.subr.mxu0 0.0
        %952 = vmatpush1.msra.mxu0 %v813
        %953 = vmatprep.subr.mxu0 0.0
        %954 = vmatpush1.msra.mxu0 %v814
        %955 = vmatprep.subr.mxu0 0.0
        %956 = vmatpush1.msra.mxu0 %v815
        %957 = vmatprep.subr.mxu0 0.0
        %958 = vmatpush1.msra.mxu0 %v816
        %959 = vmatprep.subr.mxu0 0.0
        %960 = vmatpush1.msra.mxu0 %v817
        %961 = vmatprep.subr.mxu0 0.0
        %962 = vmatpush1.msra.mxu0 %v818
        %963 = vmatprep.subr.mxu0 0.0
        %964 = vmatpush1.msra.mxu0 %v819
        %965 = vmatprep.subr.mxu0 0.0
        %966 = vmatpush1.msra.mxu0 %v820
        %967 = vmatprep.subr.mxu0 0.0
        %968 = vmatpush1.msra.mxu0 %v821
        %969 = vmatprep.subr.mxu0 0.0
        %970 = vmatpush1.msra.mxu0 %v822
        %971 = vmatprep.subr.mxu0 0.0
        %972 = vmatpush1.msra.mxu0 %v823
        %973 = vmatprep.subr.mxu0 0.0
        %974 = vmatpush1.msra.mxu0 %v824
        %975 = vmatprep.subr.mxu0 0.0
        %976 = vmatpush1.msra.mxu0 %v825
        %977 = vmatprep.subr.mxu0 0.0
        %978 = vmatpush1.msra.mxu0 %v826
        %979 = vmatprep.subr.mxu0 0.0
        %980 = vmatpush1.msra.mxu0 %v827
        %981 = vmatprep.subr.mxu0 0.0
        %982 = vmatpush1.msra.mxu0 %v828
        %983 = vmatprep.subr.mxu0 0.0
        %984 = vmatpush1.msra.mxu0 %v829
        %985 = vmatprep.subr.mxu0 0.0
        %986 = vmatpush1.msra.mxu0 %v830
        %987 = vmatprep.subr.mxu0 0.0
        %988 = vmatpush1.msra.mxu0 %v831
        %989 = vmatprep.subr.mxu0 0.0
        %990 = vmatpush1.msra.mxu0 %v832
        %991 = vmatprep.subr.mxu0 0.0
        %992 = vmatpush1.msra.mxu0 %v833
        %993 = vmatprep.subr.mxu0 0.0
        %994 = vmatpush1.msra.mxu0 %v834
        %995 = vmatprep.subr.mxu0 0.0
        %996 = vmatpush1.msra.mxu0 %v835
        %997 = vmatprep.subr.mxu0 0.0
        %998 = vmatpush1.msra.mxu0 %v836
        %999 = vmatprep.subr.mxu0 0.0
        %1000 = vmatpush1.msra.mxu0 %v837
        %1001 = vmatprep.subr.mxu0 0.0
        %1002 = vmatpush1.msra.mxu0 %v838
        %1003 = vmatprep.subr.mxu0 0.0
        %1004 = vmatpush1.msra.mxu0 %v839
        %1005 = vmatprep.subr.mxu0 0.0
        %1006 = vmatpush1.msra.mxu0 %v840
        %1007 = vmatprep.subr.mxu0 0.0
        %1008 = vmatpush1.msra.mxu0 %v841
        %1009 = vmatprep.subr.mxu0 0.0
        %1010 = vmatpush1.msra.mxu0 %v842
        %1011 = vmatprep.subr.mxu0 0.0
        %1012 = vmatpush1.msra.mxu0 %v843
        %1013 = vmatprep.mubr.f32.mxu0 %v847
        %1014 = vmatmul.mubr.f32.gmra.mrb[0].mxu0 %v846
        %v1015 = vpop.f32.mrb[0].mxu0
        %v1016 = vadd.f32 %v931, %v1015
        %v1017 = vpop.f32.mrb[0].mxu0
        %1018 = vmatprep.mubr.f32.mxu0 %v851
        %1019 = vmatmul.mubr.f32.gmra.mrb[0].mxu0 %v850
        %v1020 = vpop.f32.mrb[0].mxu0
        %v1021 = vadd.f32 %v936, %v1020
        %v1022 = vpop.f32.mrb[0].mxu0
        %1023 = vmatprep.mubr.f32.mxu0 %v855
        %1024 = vmatmul.mubr.f32.gmra.mrb[0].mxu0 %v854
        %v1025 = vpop.f32.mrb[0].mxu0
        %v1026 = vadd.f32 %v941, %v1025
        %v1027 = vpop.f32.mrb[0].mxu0
        %1028 = vmatprep.mubr.f32.mxu0 %v859
        %1029 = vmatmul.mubr.f32.gmra.mrb[0].mxu0 %v858
        %v1030 = vpop.f32.mrb[0].mxu0
        %v1031 = vadd.f32 %v946, %v1030
        %v1032 = vpop.f32.mrb[0].mxu0
        %1033 = vdwg.mxu0
        %1034 = vst.msk [vmem:[%s193] sm:$0xff] %vm648, %v1016
        %1035 = vst.msk [vmem:[%s193 + $0x8] sm:$0xff] %vm648, %v1021
        %1036 = vst.msk [vmem:[%s193 + $0x10] sm:$0xff] %vm648, %v1026
        %1037 = vst.msk [vmem:[%s193 + $0x18] sm:$0xff] %vm648, %v1031
      $region40: #{tpu_custom_call.1} parent=31 // pred_fallthru
        _
      %p1038 = scmp.lt.s32.totalorder %s18, 1
      %s1039 = scalar_select %p1038, %s18, 1
      %s1040 = smul.addr %s1039, 4
      %s1041 = smul.addr %s1040, 8
      %s1042 = scalar_lea.vmem %s3, %s1041
      // Predicated region
      $region41: #{tpu_custom_call.1} parent=31 // pred_check
        %p1043 = pneg %p114
      $region42: #{tpu_custom_call.1} parent=31 // pred_check_branch
        %1045 = sbr.rel (%p1043) target = $region44
      $region43: #{tpu_custom_call.1} parent=31 // pred_region
        _
      $region44: #{tpu_custom_call.1} parent=31 // pred_fallthru
        _
    $region32: #{tpu_custom_call.1} parent=5 // pred_fallthru
      _
    %p1046 = scmp.le.s32.totalorder 2, %s9
    // Predicated region
    $region45: #{tpu_custom_call.1} parent=5 // pred_check
      %p1047 = pneg %p1046
    $region46: #{tpu_custom_call.1} parent=5 // pred_check_branch
      %1049 = sbr.rel (%p1047) target = $region48
    $region47: #{tpu_custom_call.1} parent=5 // pred_region
      %s1050 = ssub.s32 %s9, 2
      // Predicated region
      $region49: #{tpu_custom_call.1} parent=47 // pred_check
        %p1051 = pneg %p120
      $region50: #{tpu_custom_call.1} parent=47 // pred_check_branch
        %1053 = sbr.rel (%p1051) target = $region52
      $region51: #{tpu_custom_call.1} parent=47 // pred_region
        %p1054 = scmp.lt.s32.totalorder %s20, 1
        %s1055 = scalar_select %p1054, %s20, 1
        %s1056 = smul.addr %s1055, 4
        %s1057 = smul.addr %s1056, 8
        %s1058 = scalar_lea.vmem %s3, %s1057
      $region52: #{tpu_custom_call.1} parent=47 // pred_fallthru
        _
    $region48: #{tpu_custom_call.1} parent=5 // pred_fallthru
      _
  $region6: #{tpu_custom_call.1} parent=0 // loop_footer
    %s13 = sadd.s32 1, %s9
  $region7: #{tpu_custom_call.1} parent=0 // loop_footer_branch
    %8 = sbr.rel target = $region3
  $region8: #{tpu_custom_call.1} parent=0 // loop_exit
    _

</llo_original>
